<compile_context>
chip_gen: v6e
topology: v6e:2x2x1
jax: 0.10.0
libtpu: 0.0.40
codegen_flags: <defaults>
</compile_context>

<pallas_src>
import functools

import jax
import jax.numpy as jnp
from jax.experimental import pallas as pl
from jax.experimental.pallas import tpu as pltpu


def make_unit_kernel(depth, compute_dtype):
    """Fused kernel: one grid step == one myBadTransfomerBlock for one batch tile."""

    def kernel(x_ref, w_ref, o_ref, h_ref):
        # x_ref: (bb, S, Dp)        original (padded) input
        # w_ref: (3*depth, Dp, Dp)  this layer's weights, (in, out) layout
        # o_ref: (bb, S, Dp)        final output (written only at the last layer)
        # h_ref: (bb, S, Dp)        VMEM-resident activation carried across layers
        layer = pl.program_id(1)

        @pl.when(layer == 0)
        def _():
            h_ref[...] = x_ref[...].astype(compute_dtype)

        h = h_ref[...]

        def linear_relu(v, w):
            # v: (bb, S, Dp), w: (Dp, Dp) already (in, out) -> plain v @ w.
            # Non-batched contraction: b,s fold into the MXU M dimension.
            y = jnp.einsum("bsd,de->bse", v, w,
                           preferred_element_type=jnp.float32)
            return jnp.maximum(y, 0.0).astype(compute_dtype)

        # encodingGroupA, then immediately reduce to xSquare so xA is not live
        # at the same time as xC.
        xa = h
        for i in range(depth):
            xa = linear_relu(xa, w_ref[i])
        # xSquare = xA^T @ xA  -> (bb, Dp, Dp)
        xsq = jnp.einsum("bsd,bse->bde", xa, xa,
                         preferred_element_type=jnp.float32).astype(compute_dtype)

        # encodingGroupC
        xc = h
        for i in range(depth):
            xc = linear_relu(xc, w_ref[depth + i])

        # xO = xC @ xSquare
        xo = jnp.einsum("bsd,bde->bse", xc, xsq,
                        preferred_element_type=jnp.float32).astype(compute_dtype)

        # decodingGroup
        for i in range(depth):
            xo = linear_relu(xo, w_ref[2 * depth + i])

        # keep the activation resident for the next layer
        h_ref[...] = xo

        @pl.when(layer == pl.num_programs(1) - 1)
        def _():
            o_ref[...] = xo.astype(o_ref.dtype)

    return kernel


def bad_transformer_unit(x, all_weights, depth, *, batch_block=None,
                         compute_dtype=jnp.float32):
    """myBadTransformerUnit forward.

    x:            (B, S, D)
    all_weights:  list (num_layers) of list (3*depth) of (D, D) arrays in
                  PyTorch (out_features, in_features) layout, ordered
                  [A_0..A_{d-1}, C_0..C_{d-1}, Dec_0..Dec_{d-1}].
    """
    B, S, D = x.shape
    num_layers = len(all_weights)
    Dp = ((D + 127) // 128) * 128  # lane-dense last dim

    # Stack, pre-transpose to (in, out), zero-pad to Dp (semantics-exact).
    w = jnp.stack([jnp.stack(list(bw)) for bw in all_weights])  # (L, 3d, D, D)
    w = jnp.swapaxes(w, -1, -2)                                 # (in, out)
    if Dp != D:
        w = jnp.pad(w, ((0, 0), (0, 0), (0, Dp - D), (0, Dp - D)))
        xp = jnp.pad(x, ((0, 0), (0, 0), (0, Dp - D)))
    else:
        xp = x
    w = w.astype(compute_dtype)

    # Small S: fold several batch elements into one block (MXU M occupancy).
    # Large S: one batch element per block -> "parallel" axis feeds v7x's 2 TCs.
    if batch_block is None:
        batch_block = min(B, max(1, 128 // max(S, 1)))
    if B % batch_block != 0:
        batch_block = 1
    nb = B // batch_block

    kernel = make_unit_kernel(depth, compute_dtype)

    out = pl.pallas_call(
        kernel,
        out_shape=jax.ShapeDtypeStruct((B, S, Dp), x.dtype),
        grid=(nb, num_layers),
        in_specs=[
            pl.BlockSpec((batch_block, S, Dp), lambda b, l: (b, 0, 0)),
            # Leading layer dim squeezed: kernel sees (3*depth, Dp, Dp).
            pl.BlockSpec((None, 3 * depth, Dp, Dp), lambda b, l: (l, 0, 0, 0)),
        ],
        out_specs=pl.BlockSpec((batch_block, S, Dp), lambda b, l: (b, 0, 0)),
        scratch_shapes=[pltpu.VMEM((batch_block, S, Dp), compute_dtype)],
        compiler_params=pltpu.CompilerParams(
            dimension_semantics=("parallel", "arbitrary")),
    )(xp, w)

    return out[..., :D] if Dp != D else out


# ----- pure-JAX reference for correctness checking -----
def reference_unit(x, all_weights, depth):
    for bw in all_weights:
        wA = bw[:depth]
        wC = bw[depth:2 * depth]
        wD = bw[2 * depth:]
        xa = x
        for w in wA:
            xa = jnp.maximum(xa @ w.T, 0.0)
        xc = x
        for w in wC:
            xc = jnp.maximum(xc @ w.T, 0.0)
        xsq = jnp.einsum("bsd,bse->bde", xa, xa)
        xo = jnp.einsum("bsd,bde->bse", xc, xsq)
        for w in wD:
            xo = jnp.maximum(xo @ w.T, 0.0)
        x = xo
    return x


def init_weights(key, num_layers, depth, dim, dtype=jnp.float32):
    """Deterministic weight init (stand-in for nn.Linear default init)."""
    weights = []
    for _ in range(num_layers):
        block = []
        for _ in range(3 * depth):
            key, sub = jax.random.split(key)
            block.append(
                (jax.random.normal(sub, (dim, dim), dtype) * 0.05).astype(dtype))
        weights.append(block)
    return weights


if __name__ == "__main__":
    # Small, module-consistent shapes: batch=2, seq=8, embeddingDim=32,
    # embeddingDeepth=2, num_layers=2.
    B, S, D = 2, 8, 32
    DEPTH = 2
    NUM_LAYERS = 2

    key = jax.random.PRNGKey(0)
    key, xkey = jax.random.split(key)
    x = jax.random.normal(xkey, (B, S, D), jnp.float32)

    all_weights = init_weights(key, NUM_LAYERS, DEPTH, D)

    run = jax.jit(functools.partial(bad_transformer_unit, depth=DEPTH))
    out = jax.block_until_ready(run(x, all_weights))

    ref = reference_unit(x, all_weights, DEPTH)
    assert out.shape == (B, S, D), f"bad output shape {out.shape}"
    # Both paths run matmuls on the MXU with default precision; allow for the
    # small rounding differences that implies.
    assert jnp.allclose(out, ref, atol=1e-3, rtol=1e-2), "mismatch vs reference"

    print("KERNEL_OK")
</pallas_src>

<mosaic_0001>
module attributes {stable_mosaic.version = 11 : i64} {
  func.func @kernel(%arg0: i32, %arg1: i32, %arg2: memref<2x8x128xf32, #tpu.memory_space<vmem>>, %arg3: memref<1x6x128x128xf32, #tpu.memory_space<vmem>>, %arg4: memref<2x8x128xf32, #tpu.memory_space<vmem>>, %arg5: memref<2x8x128xf32, #tpu.memory_space<vmem>>) attributes {dimension_semantics = [#tpu.dimension_semantics<parallel>, #tpu.dimension_semantics<arbitrary>], iteration_bounds = array<i64: 1, 2>, scalar_prefetch = 0 : i64, scratch_operands = 1 : i64, tpu.core_type = #tpu.core_type<tc>, window_params = [{transform_indices = @transform_0, window_bounds = array<i64: 2, 8, 128>}, {transform_indices = @transform_1, window_bounds = array<i64: 1, 6, 128, 128>}, {transform_indices = @transform_2, window_bounds = array<i64: 2, 8, 128>}]} {
    %c0_i32 = arith.constant 0 : i32
    %0 = arith.cmpi eq, %arg1, %c0_i32 : i32
    %1 = arith.extui %0 : i1 to i32
    %c0_i32_0 = arith.constant 0 : i32
    %2 = arith.cmpi ne, %1, %c0_i32_0 : i32
    scf.if %2 {
      %c0_39 = arith.constant 0 : index
      %c0_40 = arith.constant 0 : index
      %c0_41 = arith.constant 0 : index
      %40 = vector.load %arg2[%c0_39, %c0_40, %c0_41] : memref<2x8x128xf32, #tpu.memory_space<vmem>>, vector<2x8x128xf32>
      %c0_42 = arith.constant 0 : index
      %c0_43 = arith.constant 0 : index
      %c0_44 = arith.constant 0 : index
      %41 = vector.load %arg5[%c0_42, %c0_43, %c0_44] : memref<2x8x128xf32, #tpu.memory_space<vmem>>, vector<2x8x128xf32>
      tpu.vector_store %arg5[%c0_42, %c0_43, %c0_44], %40 {strides = array<i32>} : memref<2x8x128xf32, #tpu.memory_space<vmem>>, vector<2x8x128xf32>,
    } else {
    }
    %c0 = arith.constant 0 : index
    %c0_1 = arith.constant 0 : index
    %c0_2 = arith.constant 0 : index
    %3 = vector.load %arg5[%c0, %c0_1, %c0_2] : memref<2x8x128xf32, #tpu.memory_space<vmem>>, vector<2x8x128xf32>
    %c0_3 = arith.constant 0 : index
    %c0_4 = arith.constant 0 : index
    %c0_5 = arith.constant 0 : index
    %c0_6 = arith.constant 0 : index
    %4 = vector.load %arg3[%c0_3, %c0_4, %c0_5, %c0_6] : memref<1x6x128x128xf32, #tpu.memory_space<vmem>>, vector<1x1x128x128xf32>
    %5 = vector.shape_cast %4 : vector<1x1x128x128xf32> to vector<128x128xf32>
    "tpu.trace_start"() <{level = 10 : i32, message = "bsd,de->bse"}> : () -> ()
    %cst = arith.constant dense<0.000000e+00> : vector<2x8x128xf32>
    %6 = tpu.matmul %3, %5, %cst {dimension_numbers = #tpu.dot_dimension_numbers<[2], [0], [0, 1], [1], [0, 0, 0, 1, 1, 1], [], []>} : vector<2x8x128xf32>, vector<128x128xf32>, vector<2x8x128xf32> -> vector<2x8x128xf32>
    "tpu.trace_stop"() : () -> ()
    %cst_7 = arith.constant 0.000000e+00 : f32
    %7 = vector.broadcast %cst_7 : f32 to vector<2x8x128xf32>
    %8 = arith.maximumf %6, %7 : vector<2x8x128xf32>
    %c0_8 = arith.constant 0 : index
    %c1 = arith.constant 1 : index
    %c0_9 = arith.constant 0 : index
    %c0_10 = arith.constant 0 : index
    %9 = vector.load %arg3[%c0_8, %c1, %c0_9, %c0_10] : memref<1x6x128x128xf32, #tpu.memory_space<vmem>>, vector<1x1x128x128xf32>
    %10 = vector.shape_cast %9 : vector<1x1x128x128xf32> to vector<128x128xf32>
    "tpu.trace_start"() <{level = 10 : i32, message = "bsd,de->bse"}> : () -> ()
    %cst_11 = arith.constant dense<0.000000e+00> : vector<2x8x128xf32>
    %11 = tpu.matmul %8, %10, %cst_11 {dimension_numbers = #tpu.dot_dimension_numbers<[2], [0], [0, 1], [1], [0, 0, 0, 1, 1, 1], [], []>} : vector<2x8x128xf32>, vector<128x128xf32>, vector<2x8x128xf32> -> vector<2x8x128xf32>
    "tpu.trace_stop"() : () -> ()
    %cst_12 = arith.constant 0.000000e+00 : f32
    %12 = vector.broadcast %cst_12 : f32 to vector<2x8x128xf32>
    %13 = arith.maximumf %11, %12 : vector<2x8x128xf32>
    "tpu.trace_start"() <{level = 10 : i32, message = "bsd,bse->bde"}> : () -> ()
    %cst_13 = arith.constant dense<0.000000e+00> : vector<2x128x128xf32>
    %14 = tpu.matmul %13, %13, %cst_13 {dimension_numbers = #tpu.dot_dimension_numbers<[1], [1], [2], [2], [0, 0, 0, 2, 1, 2], [0], [0]>} : vector<2x8x128xf32>, vector<2x8x128xf32>, vector<2x128x128xf32> -> vector<2x128x128xf32>
    "tpu.trace_stop"() : () -> ()
    %c0_14 = arith.constant 0 : index
    %c2 = arith.constant 2 : index
    %c0_15 = arith.constant 0 : index
    %c0_16 = arith.constant 0 : index
    %15 = vector.load %arg3[%c0_14, %c2, %c0_15, %c0_16] : memref<1x6x128x128xf32, #tpu.memory_space<vmem>>, vector<1x1x128x128xf32>
    %16 = vector.shape_cast %15 : vector<1x1x128x128xf32> to vector<128x128xf32>
    "tpu.trace_start"() <{level = 10 : i32, message = "bsd,de->bse"}> : () -> ()
    %cst_17 = arith.constant dense<0.000000e+00> : vector<2x8x128xf32>
    %17 = tpu.matmul %3, %16, %cst_17 {dimension_numbers = #tpu.dot_dimension_numbers<[2], [0], [0, 1], [1], [0, 0, 0, 1, 1, 1], [], []>} : vector<2x8x128xf32>, vector<128x128xf32>, vector<2x8x128xf32> -> vector<2x8x128xf32>
    "tpu.trace_stop"() : () -> ()
    %cst_18 = arith.constant 0.000000e+00 : f32
    %18 = vector.broadcast %cst_18 : f32 to vector<2x8x128xf32>
    %19 = arith.maximumf %17, %18 : vector<2x8x128xf32>
    %c0_19 = arith.constant 0 : index
    %c3 = arith.constant 3 : index
    %c0_20 = arith.constant 0 : index
    %c0_21 = arith.constant 0 : index
    %20 = vector.load %arg3[%c0_19, %c3, %c0_20, %c0_21] : memref<1x6x128x128xf32, #tpu.memory_space<vmem>>, vector<1x1x128x128xf32>
    %21 = vector.shape_cast %20 : vector<1x1x128x128xf32> to vector<128x128xf32>
    "tpu.trace_start"() <{level = 10 : i32, message = "bsd,de->bse"}> : () -> ()
    %cst_22 = arith.constant dense<0.000000e+00> : vector<2x8x128xf32>
    %22 = tpu.matmul %19, %21, %cst_22 {dimension_numbers = #tpu.dot_dimension_numbers<[2], [0], [0, 1], [1], [0, 0, 0, 1, 1, 1], [], []>} : vector<2x8x128xf32>, vector<128x128xf32>, vector<2x8x128xf32> -> vector<2x8x128xf32>
    "tpu.trace_stop"() : () -> ()
    %cst_23 = arith.constant 0.000000e+00 : f32
    %23 = vector.broadcast %cst_23 : f32 to vector<2x8x128xf32>
    %24 = arith.maximumf %22, %23 : vector<2x8x128xf32>
    "tpu.trace_start"() <{level = 10 : i32, message = "bsd,bde->bse"}> : () -> ()
    %cst_24 = arith.constant dense<0.000000e+00> : vector<2x8x128xf32>
    %25 = tpu.matmul %24, %14, %cst_24 {dimension_numbers = #tpu.dot_dimension_numbers<[2], [1], [1], [2], [0, 0, 0, 1, 1, 2], [0], [0]>} : vector<2x8x128xf32>, vector<2x128x128xf32>, vector<2x8x128xf32> -> vector<2x8x128xf32>
    "tpu.trace_stop"() : () -> ()
    %c0_25 = arith.constant 0 : index
    %c4 = arith.constant 4 : index
    %c0_26 = arith.constant 0 : index
    %c0_27 = arith.constant 0 : index
    %26 = vector.load %arg3[%c0_25, %c4, %c0_26, %c0_27] : memref<1x6x128x128xf32, #tpu.memory_space<vmem>>, vector<1x1x128x128xf32>
    %27 = vector.shape_cast %26 : vector<1x1x128x128xf32> to vector<128x128xf32>
    "tpu.trace_start"() <{level = 10 : i32, message = "bsd,de->bse"}> : () -> ()
    %cst_28 = arith.constant dense<0.000000e+00> : vector<2x8x128xf32>
    %28 = tpu.matmul %25, %27, %cst_28 {dimension_numbers = #tpu.dot_dimension_numbers<[2], [0], [0, 1], [1], [0, 0, 0, 1, 1, 1], [], []>} : vector<2x8x128xf32>, vector<128x128xf32>, vector<2x8x128xf32> -> vector<2x8x128xf32>
    "tpu.trace_stop"() : () -> ()
    %cst_29 = arith.constant 0.000000e+00 : f32
    %29 = vector.broadcast %cst_29 : f32 to vector<2x8x128xf32>
    %30 = arith.maximumf %28, %29 : vector<2x8x128xf32>
    %c0_30 = arith.constant 0 : index
    %c5 = arith.constant 5 : index
    %c0_31 = arith.constant 0 : index
    %c0_32 = arith.constant 0 : index
    %31 = vector.load %arg3[%c0_30, %c5, %c0_31, %c0_32] : memref<1x6x128x128xf32, #tpu.memory_space<vmem>>, vector<1x1x128x128xf32>
    %32 = vector.shape_cast %31 : vector<1x1x128x128xf32> to vector<128x128xf32>
    "tpu.trace_start"() <{level = 10 : i32, message = "bsd,de->bse"}> : () -> ()
    %cst_33 = arith.constant dense<0.000000e+00> : vector<2x8x128xf32>
    %33 = tpu.matmul %30, %32, %cst_33 {dimension_numbers = #tpu.dot_dimension_numbers<[2], [0], [0, 1], [1], [0, 0, 0, 1, 1, 1], [], []>} : vector<2x8x128xf32>, vector<128x128xf32>, vector<2x8x128xf32> -> vector<2x8x128xf32>
    "tpu.trace_stop"() : () -> ()
    %cst_34 = arith.constant 0.000000e+00 : f32
    %34 = vector.broadcast %cst_34 : f32 to vector<2x8x128xf32>
    %35 = arith.maximumf %33, %34 : vector<2x8x128xf32>
    %c0_35 = arith.constant 0 : index
    %c0_36 = arith.constant 0 : index
    %c0_37 = arith.constant 0 : index
    %36 = vector.load %arg5[%c0_35, %c0_36, %c0_37] : memref<2x8x128xf32, #tpu.memory_space<vmem>>, vector<2x8x128xf32>
    tpu.vector_store %arg5[%c0_35, %c0_36, %c0_37], %35 {strides = array<i32>} : memref<2x8x128xf32, #tpu.memory_space<vmem>>, vector<2x8x128xf32>,
    %c1_i32 = arith.constant 1 : i32
    %37 = arith.cmpi eq, %arg1, %c1_i32 : i32
    %38 = arith.extui %37 : i1 to i32
    %c0_i32_38 = arith.constant 0 : i32
    %39 = arith.cmpi ne, %38, %c0_i32_38 : i32
    scf.if %39 {
      %c0_39 = arith.constant 0 : index
      %c0_40 = arith.constant 0 : index
      %c0_41 = arith.constant 0 : index
      %40 = vector.load %arg4[%c0_39, %c0_40, %c0_41] : memref<2x8x128xf32, #tpu.memory_space<vmem>>, vector<2x8x128xf32>
      tpu.vector_store %arg4[%c0_39, %c0_40, %c0_41], %35 {strides = array<i32>} : memref<2x8x128xf32, #tpu.memory_space<vmem>>, vector<2x8x128xf32>,
    } else {
    }
    return
  }
  func.func @transform_0(%arg0: i32, %arg1: i32) -> (i32, i32, i32) {
    %c0_i32 = arith.constant 0 : i32
    %c0_i32_0 = arith.constant 0 : i32
    %c0_i32_1 = arith.constant 0 : i32
    return %arg0, %c0_i32, %c0_i32_0 : i32, i32, i32
  }
  func.func @transform_1(%arg0: i32, %arg1: i32) -> (i32, i32, i32, i32) {
    %c0_i32 = arith.constant 0 : i32
    %c0_i32_0 = arith.constant 0 : i32
    %c0_i32_1 = arith.constant 0 : i32
    %c0_i32_2 = arith.constant 0 : i32
    return %arg1, %c0_i32, %c0_i32_0, %c0_i32_1 : i32, i32, i32, i32
  }
  func.func @transform_2(%arg0: i32, %arg1: i32) -> (i32, i32, i32) {
    %c0_i32 = arith.constant 0 : i32
    %c0_i32_0 = arith.constant 0 : i32
    %c0_i32_1 = arith.constant 0 : i32
    return %arg0, %c0_i32, %c0_i32_0 : i32, i32, i32
  }
}

</mosaic_0001>

<llo_original>
// kernel: bad_transformer_unit.1
$region0: #{bad_transformer_unit.1}
  #allocation0 [shape = 'u32[]', space=smem, size = 0x4, offset = 0x4, fixed_abs, tag = 'smem constant byte address 0x4 - core index']
  #allocation1 [shape = 'u32[144,128]{1,0:T(1,128)}', space=vmem, size = 0x12000, scoped, tag = 'internal scratch']
  #allocation2 [shape = 'f32[2,8,128]{2,1,0:T(8,128)}', space=vmem, size = 0x2000, scoped, tag = 'scratch operand']
  %s0 = inlined_call_operand.vmem [shape: f32[2,8,128], index: 0, kind: input, shape index: {}]
  %s1 = inlined_call_operand.vmem [shape: f32[2,6,128,128], index: 1, kind: input, shape index: {}]
  %s2 = inlined_call_operand.hbm [shape: f32[2,8,128], index: 2, kind: output, shape index: {}]
  %s3 = sld [smem:[#allocation0]]
  $region49: #{bad_transformer_unit.1} parent=0
    _
  %s5 = ssub.s32 1, %s3
  %s6 = scalar_select 0, %s5, %s3
  $region1: #{bad_transformer_unit.1} parent=0
    #allocation3 [shape = 'u8[8192]{0}', space=vmem, size = 0x2000, scoped, tag = 'output window, operand 0, single buffered']
    #allocation4 [shape = 's32[2]{0}', space=sflag, size = 0x8, scoped, tag = 'scoped memory for bad_transformer_unit.1']
    %7 = vsyncpa [#allocation4], 0
    loop: start=0, step=1, limit=4
    $region2: #{bad_transformer_unit.1} parent=1 // loop_pre_header
      _
    $region3: #{bad_transformer_unit.1} parent=1 // loop_header
      %s9 = sphi 0, %s13
      %p10 = scmp.ge.s32.totalorder %s9, 4
      %s16 = sphi 0, %s28
      %s17 = sphi 0, %s24
      %s18 = sphi 0, %s16
      %s19 = sphi 0, %s17
      %s20 = sphi 0, %s18
      %s21 = sphi 0, %s19
      %s31 = sphi 0, %s33
      %s34 = sphi 0, %s31
      %s35 = sphi 0, %s34
      %s51 = sphi 0, %s35
      %s57 = sphi 0, %s59
      %s60 = sphi 0, %s57
      %s61 = sphi 0, %s60
      %s77 = sphi 0, %s61
      %s83 = sphi 0, %s85
      %s86 = sphi 0, %s83
      %s87 = sphi 0, %s86
      %s103 = sphi 0, %s87
    $region4: #{bad_transformer_unit.1} parent=1 // loop_header_branch
      %12 = sbr.rel (%p10) target = $region8
    $region5: #{bad_transformer_unit.1} parent=1 // loop_body
      %s14 = ssub.s32 %s9, 1
      %s15 = ssub.s32 %s9, 2
      %s22 = sadd.s32 1, %s17
      %p23 = scmp.ge.s32.totalorder %s22, 2
      %s24 = scalar_select %p23, 0, %s22
      %s25 = sadd.s32 1, %s16
      %s26 = scalar_select %p23, %s25, %s16
      %p27 = scmp.ge.s32.totalorder %s26, 1
      %s28 = scalar_select %p27, 0, %s26
      %s29 = ssub.s32 %s16, %s28
      %p30 = scmp.eq.s32.totalorder %s29, 0
      %s32 = sadd.s32 %s31, 1
      %s33 = scalar_select %p30, %s31, %s32
      %p36 = pneg %p30
      %p37 = scmp.eq.s32.totalorder %s9, 1
      %p38 = por %p36, %p37
      %p39 = scmp.ne.s32.totalorder %s31, %s34
      %p40 = scmp.eq.s32.totalorder %s9, 0
      %p41 = por %p39, %p40
      %p42 = scmp.ne.s32.totalorder %s31, %s34
      %p43 = scmp.eq.s32.totalorder %s14, 1
      %p44 = por %p42, %p43
      %p45 = scmp.ne.s32.totalorder %s34, %s35
      %p46 = scmp.eq.s32.totalorder %s14, 0
      %p47 = por %p45, %p46
      %p48 = scmp.ne.s32.totalorder %s34, %s35
      %p49 = scmp.eq.s32.totalorder %s15, 1
      %p50 = por %p48, %p49
      %p52 = scmp.ne.s32.totalorder %s35, %s51
      %p53 = scmp.eq.s32.totalorder %s15, 0
      %p54 = por %p52, %p53
      %s55 = ssub.s32 %s17, %s24
      %p56 = scmp.eq.s32.totalorder %s55, 0
      %s58 = sadd.s32 %s57, 1
      %s59 = scalar_select %p56, %s57, %s58
      %p62 = pneg %p56
      %p63 = scmp.eq.s32.totalorder %s9, 1
      %p64 = por %p62, %p63
      %p65 = scmp.ne.s32.totalorder %s57, %s60
      %p66 = scmp.eq.s32.totalorder %s9, 0
      %p67 = por %p65, %p66
      %p68 = scmp.ne.s32.totalorder %s57, %s60
      %p69 = scmp.eq.s32.totalorder %s14, 1
      %p70 = por %p68, %p69
      %p71 = scmp.ne.s32.totalorder %s60, %s61
      %p72 = scmp.eq.s32.totalorder %s14, 0
      %p73 = por %p71, %p72
      %p74 = scmp.ne.s32.totalorder %s60, %s61
      %p75 = scmp.eq.s32.totalorder %s15, 1
      %p76 = por %p74, %p75
      %p78 = scmp.ne.s32.totalorder %s61, %s77
      %p79 = scmp.eq.s32.totalorder %s15, 0
      %p80 = por %p78, %p79
      %s81 = ssub.s32 %s16, %s28
      %p82 = scmp.eq.s32.totalorder %s81, 0
      %s84 = sadd.s32 %s83, 1
      %s85 = scalar_select %p82, %s83, %s84
      %p88 = pneg %p82
      %p89 = scmp.eq.s32.totalorder %s9, 1
      %p90 = por %p88, %p89
      %p91 = scmp.ne.s32.totalorder %s83, %s86
      %p92 = scmp.eq.s32.totalorder %s9, 0
      %p93 = por %p91, %p92
      %p94 = scmp.ne.s32.totalorder %s83, %s86
      %p95 = scmp.eq.s32.totalorder %s14, 1
      %p96 = por %p94, %p95
      %p97 = scmp.ne.s32.totalorder %s86, %s87
      %p98 = scmp.eq.s32.totalorder %s14, 0
      %p99 = por %p97, %p98
      %p100 = scmp.ne.s32.totalorder %s86, %s87
      %p101 = scmp.eq.s32.totalorder %s15, 1
      %p102 = por %p100, %p101
      %p104 = scmp.ne.s32.totalorder %s87, %s103
      %p105 = scmp.eq.s32.totalorder %s15, 0
      %p106 = por %p104, %p105
      %p107 = scmp.le.s32.totalorder 1, %s9
      %p108 = scmp.lt.s32.totalorder %s9, 3
      %p109 = pnand %p107, %p108
      %p110 = pneg %p109
      // Predicated region
      $region9: #{bad_transformer_unit.1} parent=5 // pred_check
        _
      $region10: #{bad_transformer_unit.1} parent=5 // pred_check_branch
        %112 = sbr.rel (%p109) target = $region12
      $region11: #{bad_transformer_unit.1} parent=5 // pred_region
        %s113 = ssub.s32 %s9, 1
        // Predicated region
        $region13: #{bad_transformer_unit.1} parent=11 // pred_check
          %p114 = pneg %p47
        $region14: #{bad_transformer_unit.1} parent=11 // pred_check_branch
          %116 = sbr.rel (%p114) target = $region16
        $region15: #{bad_transformer_unit.1} parent=11 // pred_region
          %s117 = smul.u32 2, %s18
          %p118 = scmp.lt.s32.totalorder %s117, 1
          %s119 = scalar_select %p118, %s117, 1
          %s120 = smul.addr %s119, 8
          %s121 = scalar_lea.vmem %s0, %s120
          %s122 = smul.u32 2, %s18
        $region16: #{bad_transformer_unit.1} parent=11 // pred_fallthru
          _
      $region12: #{bad_transformer_unit.1} parent=5 // pred_fallthru
        _
      %p123 = scmp.lt.s32.totalorder %s9, 2
      // Predicated region
      $region17: #{bad_transformer_unit.1} parent=5 // pred_check
        %p124 = pneg %p123
      $region18: #{bad_transformer_unit.1} parent=5 // pred_check_branch
        %126 = sbr.rel (%p124) target = $region20
      $region19: #{bad_transformer_unit.1} parent=5 // pred_region
        // Predicated region
        $region21: #{bad_transformer_unit.1} parent=19 // pred_check
          %p127 = pneg %p67
        $region22: #{bad_transformer_unit.1} parent=19 // pred_check_branch
          %129 = sbr.rel (%p127) target = $region24
        $region23: #{bad_transformer_unit.1} parent=19 // pred_region
          %p130 = scmp.lt.s32.totalorder %s17, 1
          %s131 = scalar_select %p130, %s17, 1
          %s132 = smul.addr %s131, 96
          %s133 = smul.addr %s132, 8
          %s134 = scalar_lea.vmem %s1, %s133
        $region24: #{bad_transformer_unit.1} parent=19 // pred_fallthru
          _
      $region20: #{bad_transformer_unit.1} parent=5 // pred_fallthru
        _
      %p135 = scmp.le.s32.totalorder 1, %s9
      %p136 = scmp.lt.s32.totalorder %s9, 3
      %p137 = pnand %p135, %p136
      %p138 = pneg %p137
      // Predicated region
      $region25: #{bad_transformer_unit.1} parent=5 // pred_check
        _
      $region26: #{bad_transformer_unit.1} parent=5 // pred_check_branch
        %140 = sbr.rel (%p137) target = $region28
      $region27: #{bad_transformer_unit.1} parent=5 // pred_region
        %s141 = ssub.s32 %s9, 1
        %s142 = smul.u32 2, %s18
        %p143 = scmp.lt.s32.totalorder %s142, 1
        %s144 = scalar_select %p143, %s142, 1
        %s145 = smul.addr %s144, 8
        %s146 = scalar_lea.vmem %s0, %s145
        %p147 = pneg %p47
        %p148 = pneg %p44
        %p149 = scmp.lt.s32.totalorder %s19, 1
        %s150 = scalar_select %p149, %s19, 1
        %s151 = smul.addr %s150, 96
        %s152 = smul.addr %s151, 8
        %s153 = scalar_lea.vmem %s1, %s152
        %p154 = pneg %p73
        %p155 = pneg %p70
        %p156 = pneg %p99
        %p157 = pneg %p96
        %s158 = smul.u32 2, %s18
        %p159 = scmp.lt.s32.totalorder %s158, 1
        %s160 = scalar_select %p159, %s158, 1
        %s161 = smul.addr %s160, 8
        %s162 = scalar_lea.vmem %s0, %s161
        %s163 = smul.u32 2, %s18
        %p164 = scmp.lt.s32.totalorder %s19, 1
        %s165 = scalar_select %p164, %s19, 1
        %s166 = smul.addr %s165, 96
        %s167 = smul.addr %s166, 8
        %s168 = scalar_lea.vmem %s1, %s167
        %s169 = smul.u32 2, %s18
        %p170 = scmp.eq.s32.totalorder %s19, 0
        // Predicated region
        $region29: #{bad_transformer_unit.1} parent=27 // pred_check
          %p171 = pneg %p170
        $region30: #{bad_transformer_unit.1} parent=27 // pred_check_branch
          %173 = sbr.rel (%p171) target = $region32
        $region31: #{bad_transformer_unit.1} parent=27 // pred_region
          %v174 = vld [vmem:[%s162] sm:$0xff]
          %v175 = vld [vmem:[%s162 + $0x8] sm:$0xff]
          %176 = vst [vmem:[#allocation2] sm:$0xff] %v174
          %177 = vst [vmem:[#allocation2 + $0x8] sm:$0xff] %v175
        $region32: #{bad_transformer_unit.1} parent=27 // pred_fallthru
          _
        %v178 = vld [vmem:[#allocation2] sm:$0xff]
        %v179 = vld [vmem:[#allocation2 + $0x8] sm:$0xff]
        %v180 = vld [vmem:[%s168] sm:$0xff]
        %v181 = vld [vmem:[%s168 + $0x8] sm:$0xff]
        %v182 = vld [vmem:[%s168 + $0x10] sm:$0xff]
        %v183 = vld [vmem:[%s168 + $0x18] sm:$0xff]
        %v184 = vld [vmem:[%s168 + $0x20] sm:$0xff]
        %v185 = vld [vmem:[%s168 + $0x28] sm:$0xff]
        %v186 = vld [vmem:[%s168 + $0x30] sm:$0xff]
        %v187 = vld [vmem:[%s168 + $0x38] sm:$0xff]
        %v188 = vld [vmem:[%s168 + $0x40] sm:$0xff]
        %v189 = vld [vmem:[%s168 + $0x48] sm:$0xff]
        %v190 = vld [vmem:[%s168 + $0x50] sm:$0xff]
        %v191 = vld [vmem:[%s168 + $0x58] sm:$0xff]
        %v192 = vld [vmem:[%s168 + $0x60] sm:$0xff]
        %v193 = vld [vmem:[%s168 + $0x68] sm:$0xff]
        %v194 = vld [vmem:[%s168 + $0x70] sm:$0xff]
        %v195 = vld [vmem:[%s168 + $0x78] sm:$0xff]
        %196 = vmatprep.subr.mxu0 0.0
        %197 = vmatpush1.msra.mxu0 %v195
        %198 = vmatprep.subr.mxu0 0.0
        %199 = vmatpush1.msra.mxu0 %v194
        %200 = vmatprep.subr.mxu0 0.0
        %201 = vmatpush1.msra.mxu0 %v193
        %202 = vmatprep.subr.mxu0 0.0
        %203 = vmatpush1.msra.mxu0 %v192
        %204 = vmatprep.subr.mxu0 0.0
        %205 = vmatpush1.msra.mxu0 %v191
        %206 = vmatprep.subr.mxu0 0.0
        %207 = vmatpush1.msra.mxu0 %v190
        %208 = vmatprep.subr.mxu0 0.0
        %209 = vmatpush1.msra.mxu0 %v189
        %210 = vmatprep.subr.mxu0 0.0
        %211 = vmatpush1.msra.mxu0 %v188
        %212 = vmatprep.subr.mxu0 0.0
        %213 = vmatpush1.msra.mxu0 %v187
        %214 = vmatprep.subr.mxu0 0.0
        %215 = vmatpush1.msra.mxu0 %v186
        %216 = vmatprep.subr.mxu0 0.0
        %217 = vmatpush1.msra.mxu0 %v185
        %218 = vmatprep.subr.mxu0 0.0
        %219 = vmatpush1.msra.mxu0 %v184
        %220 = vmatprep.subr.mxu0 0.0
        %221 = vmatpush1.msra.mxu0 %v183
        %222 = vmatprep.subr.mxu0 0.0
        %223 = vmatpush1.msra.mxu0 %v182
        %224 = vmatprep.subr.mxu0 0.0
        %225 = vmatpush1.msra.mxu0 %v181
        %226 = vmatprep.subr.mxu0 0.0
        %227 = vmatpush1.msra.mxu0 %v180
        %228 = vmatprep.subr.mxu0 0.0
        %229 = vmatpush2.msra.mxu0 0.0
        %230 = vmatprep.subr.mxu0 0.0
        %231 = vmatpush2.msra.mxu0 0.0
        %232 = vmatprep.subr.mxu0 0.0
        %233 = vmatpush2.msra.mxu0 0.0
        %234 = vmatprep.subr.mxu0 0.0
        %235 = vmatpush2.msra.mxu0 0.0
        %236 = vmatprep.subr.mxu0 0.0
        %237 = vmatpush2.msra.mxu0 0.0
        %238 = vmatprep.subr.mxu0 0.0
        %239 = vmatpush2.msra.mxu0 0.0
        %240 = vmatprep.subr.mxu0 0.0
        %241 = vmatpush2.msra.mxu0 0.0
        %242 = vmatprep.subr.mxu0 0.0
        %243 = vmatpush2.msra.mxu0 0.0
        %244 = vmatprep.subr.mxu0 0.0
        %245 = vmatpush2.msra.mxu0 0.0
        %246 = vmatprep.subr.mxu0 0.0
        %247 = vmatpush2.msra.mxu0 0.0
        %248 = vmatprep.subr.mxu0 0.0
        %249 = vmatpush2.msra.mxu0 0.0
        %250 = vmatprep.subr.mxu0 0.0
        %251 = vmatpush2.msra.mxu0 0.0
        %252 = vmatprep.subr.mxu0 0.0
        %253 = vmatpush2.msra.mxu0 0.0
        %254 = vmatprep.subr.mxu0 0.0
        %255 = vmatpush2.msra.mxu0 0.0
        %256 = vmatprep.subr.mxu0 0.0
        %257 = vmatpush2.msra.mxu0 0.0
        %258 = vmatprep.subr.mxu0 0.0
        %259 = vmatpush2.msra.mxu0 0.0
        %260 = vmatprep.mubr.f32.mxu0 0.0
        %261 = vmatmul.mubr.f32.gmra.mxu0 %v178
        %v262 = vpop.f32.mrf.mxu0
        %v263 = vadd.f32 0.0, %v262
        %v264 = vpop.f32.mrf.mxu0
        %265 = vmatprep.mubr.f32.mxu0 0.0
        %266 = vmatmul.mubr.f32.gmra.mxu0 %v179
        %v267 = vpop.f32.mrf.mxu0
        %v268 = vadd.f32 0.0, %v267
        %v269 = vpop.f32.mrf.mxu0
        %270 = vdwg.mxu0
        %v271 = vmax.f32 %v263, 0.0
        %v272 = vmax.f32 %v268, 0.0
        %s273 = scalar_lea.vmem %s168, 128
        %v274 = vld [vmem:[%s273] sm:$0xff]
        %v275 = vld [vmem:[%s273 + $0x8] sm:$0xff]
        %v276 = vld [vmem:[%s273 + $0x10] sm:$0xff]
        %v277 = vld [vmem:[%s273 + $0x18] sm:$0xff]
        %v278 = vld [vmem:[%s273 + $0x20] sm:$0xff]
        %v279 = vld [vmem:[%s273 + $0x28] sm:$0xff]
        %v280 = vld [vmem:[%s273 + $0x30] sm:$0xff]
        %v281 = vld [vmem:[%s273 + $0x38] sm:$0xff]
        %v282 = vld [vmem:[%s273 + $0x40] sm:$0xff]
        %v283 = vld [vmem:[%s273 + $0x48] sm:$0xff]
        %v284 = vld [vmem:[%s273 + $0x50] sm:$0xff]
        %v285 = vld [vmem:[%s273 + $0x58] sm:$0xff]
        %v286 = vld [vmem:[%s273 + $0x60] sm:$0xff]
        %v287 = vld [vmem:[%s273 + $0x68] sm:$0xff]
        %v288 = vld [vmem:[%s273 + $0x70] sm:$0xff]
        %v289 = vld [vmem:[%s273 + $0x78] sm:$0xff]
        %290 = vmatprep.subr.mxu0 0.0
        %291 = vmatpush1.msra.mxu0 %v289
        %292 = vmatprep.subr.mxu0 0.0
        %293 = vmatpush1.msra.mxu0 %v288
        %294 = vmatprep.subr.mxu0 0.0
        %295 = vmatpush1.msra.mxu0 %v287
        %296 = vmatprep.subr.mxu0 0.0
        %297 = vmatpush1.msra.mxu0 %v286
        %298 = vmatprep.subr.mxu0 0.0
        %299 = vmatpush1.msra.mxu0 %v285
        %300 = vmatprep.subr.mxu0 0.0
        %301 = vmatpush1.msra.mxu0 %v284
        %302 = vmatprep.subr.mxu0 0.0
        %303 = vmatpush1.msra.mxu0 %v283
        %304 = vmatprep.subr.mxu0 0.0
        %305 = vmatpush1.msra.mxu0 %v282
        %306 = vmatprep.subr.mxu0 0.0
        %307 = vmatpush1.msra.mxu0 %v281
        %308 = vmatprep.subr.mxu0 0.0
        %309 = vmatpush1.msra.mxu0 %v280
        %310 = vmatprep.subr.mxu0 0.0
        %311 = vmatpush1.msra.mxu0 %v279
        %312 = vmatprep.subr.mxu0 0.0
        %313 = vmatpush1.msra.mxu0 %v278
        %314 = vmatprep.subr.mxu0 0.0
        %315 = vmatpush1.msra.mxu0 %v277
        %316 = vmatprep.subr.mxu0 0.0
        %317 = vmatpush1.msra.mxu0 %v276
        %318 = vmatprep.subr.mxu0 0.0
        %319 = vmatpush1.msra.mxu0 %v275
        %320 = vmatprep.subr.mxu0 0.0
        %321 = vmatpush1.msra.mxu0 %v274
        %322 = vmatprep.subr.mxu0 0.0
        %323 = vmatpush2.msra.mxu0 0.0
        %324 = vmatprep.subr.mxu0 0.0
        %325 = vmatpush2.msra.mxu0 0.0
        %326 = vmatprep.subr.mxu0 0.0
        %327 = vmatpush2.msra.mxu0 0.0
        %328 = vmatprep.subr.mxu0 0.0
        %329 = vmatpush2.msra.mxu0 0.0
        %330 = vmatprep.subr.mxu0 0.0
        %331 = vmatpush2.msra.mxu0 0.0
        %332 = vmatprep.subr.mxu0 0.0
        %333 = vmatpush2.msra.mxu0 0.0
        %334 = vmatprep.subr.mxu0 0.0
        %335 = vmatpush2.msra.mxu0 0.0
        %336 = vmatprep.subr.mxu0 0.0
        %337 = vmatpush2.msra.mxu0 0.0
        %338 = vmatprep.subr.mxu0 0.0
        %339 = vmatpush2.msra.mxu0 0.0
        %340 = vmatprep.subr.mxu0 0.0
        %341 = vmatpush2.msra.mxu0 0.0
        %342 = vmatprep.subr.mxu0 0.0
        %343 = vmatpush2.msra.mxu0 0.0
        %344 = vmatprep.subr.mxu0 0.0
        %345 = vmatpush2.msra.mxu0 0.0
        %346 = vmatprep.subr.mxu0 0.0
        %347 = vmatpush2.msra.mxu0 0.0
        %348 = vmatprep.subr.mxu0 0.0
        %349 = vmatpush2.msra.mxu0 0.0
        %350 = vmatprep.subr.mxu0 0.0
        %351 = vmatpush2.msra.mxu0 0.0
        %352 = vmatprep.subr.mxu0 0.0
        %353 = vmatpush2.msra.mxu0 0.0
        %354 = vmatprep.mubr.f32.mxu0 0.0
        %355 = vmatmul.mubr.f32.gmra.mxu0 %v271
        %v356 = vpop.f32.mrf.mxu0
        %v357 = vadd.f32 0.0, %v356
        %v358 = vpop.f32.mrf.mxu0
        %359 = vmatprep.mubr.f32.mxu0 0.0
        %360 = vmatmul.mubr.f32.gmra.mxu0 %v272
        %v361 = vpop.f32.mrf.mxu0
        %v362 = vadd.f32 0.0, %v361
        %v363 = vpop.f32.mrf.mxu0
        %364 = vdwg.mxu0
        %v365 = vmax.f32 %v357, 0.0
        %v366 = vmax.f32 %v362, 0.0
        %367 = vxpose.xlu0.b32.start [1/16] %v365, 128
        %368 = vxpose.xlu0.b32.cont [2/16] 0.0, 128
        %369 = vxpose.xlu0.b32.cont [3/16] 0.0, 128
        %370 = vxpose.xlu0.b32.cont [4/16] 0.0, 128
        %371 = vxpose.xlu0.b32.cont [5/16] 0.0, 128
        %372 = vxpose.xlu0.b32.cont [6/16] 0.0, 128
        %373 = vxpose.xlu0.b32.cont [7/16] 0.0, 128
        %374 = vxpose.xlu0.b32.cont [8/16] 0.0, 128
        %375 = vxpose.xlu0.b32.cont [9/16] 0.0, 128
        %376 = vxpose.xlu0.b32.cont [10/16] 0.0, 128
        %377 = vxpose.xlu0.b32.cont [11/16] 0.0, 128
        %378 = vxpose.xlu0.b32.cont [12/16] 0.0, 128
        %379 = vxpose.xlu0.b32.cont [13/16] 0.0, 128
        %380 = vxpose.xlu0.b32.cont [14/16] 0.0, 128
        %381 = vxpose.xlu0.b32.cont [15/16] 0.0, 128
        %382 = vxpose.xlu0.b32.end [16/16] 0.0, 128
        %v383 = vpop.trf.xlu0
        %v384 = vpop.trf.xlu0
        %v385 = vpop.trf.xlu0
        %v386 = vpop.trf.xlu0
        %v387 = vpop.trf.xlu0
        %v388 = vpop.trf.xlu0
        %v389 = vpop.trf.xlu0
        %v390 = vpop.trf.xlu0
        %v391 = vpop.trf.xlu0
        %v392 = vpop.trf.xlu0
        %v393 = vpop.trf.xlu0
        %v394 = vpop.trf.xlu0
        %v395 = vpop.trf.xlu0
        %v396 = vpop.trf.xlu0
        %v397 = vpop.trf.xlu0
        %v398 = vpop.trf.xlu0
        %vm399 = vcmask 64512
        %v401 = vsel %vm399, %v383, 0
        %v404 = vsel %vm399, %v384, 0
        %v407 = vsel %vm399, %v385, 0
        %v410 = vsel %vm399, %v386, 0
        %v413 = vsel %vm399, %v387, 0
        %v416 = vsel %vm399, %v388, 0
        %v419 = vsel %vm399, %v389, 0
        %v422 = vsel %vm399, %v390, 0
        %v425 = vsel %vm399, %v391, 0
        %v428 = vsel %vm399, %v392, 0
        %v431 = vsel %vm399, %v393, 0
        %v434 = vsel %vm399, %v394, 0
        %v437 = vsel %vm399, %v395, 0
        %v440 = vsel %vm399, %v396, 0
        %v443 = vsel %vm399, %v397, 0
        %v446 = vsel %vm399, %v398, 0
        %448 = vmatprep.subr.mxu0 0.0
        %449 = vmatpush1.msra.mxu0 0.0
        %450 = vmatprep.subr.mxu0 0.0
        %451 = vmatpush1.msra.mxu0 0.0
        %452 = vmatprep.subr.mxu0 0.0
        %453 = vmatpush1.msra.mxu0 0.0
        %454 = vmatprep.subr.mxu0 0.0
        %455 = vmatpush1.msra.mxu0 0.0
        %456 = vmatprep.subr.mxu0 0.0
        %457 = vmatpush1.msra.mxu0 0.0
        %458 = vmatprep.subr.mxu0 0.0
        %459 = vmatpush1.msra.mxu0 0.0
        %460 = vmatprep.subr.mxu0 0.0
        %461 = vmatpush1.msra.mxu0 0.0
        %462 = vmatprep.subr.mxu0 0.0
        %463 = vmatpush1.msra.mxu0 0.0
        %464 = vmatprep.subr.mxu0 0.0
        %465 = vmatpush1.msra.mxu0 0.0
        %466 = vmatprep.subr.mxu0 0.0
        %467 = vmatpush1.msra.mxu0 0.0
        %468 = vmatprep.subr.mxu0 0.0
        %469 = vmatpush1.msra.mxu0 0.0
        %470 = vmatprep.subr.mxu0 0.0
        %471 = vmatpush1.msra.mxu0 0.0
        %472 = vmatprep.subr.mxu0 0.0
        %473 = vmatpush1.msra.mxu0 0.0
        %474 = vmatprep.subr.mxu0 0.0
        %475 = vmatpush1.msra.mxu0 0.0
        %476 = vmatprep.subr.mxu0 0.0
        %477 = vmatpush1.msra.mxu0 0.0
        %478 = vmatprep.subr.mxu0 0.0
        %479 = vmatpush1.msra.mxu0 %v365
        %480 = vmatprep.subr.mxu0 0.0
        %481 = vmatpush2.msra.mxu0 0.0
        %482 = vmatprep.subr.mxu0 0.0
        %483 = vmatpush2.msra.mxu0 0.0
        %484 = vmatprep.subr.mxu0 0.0
        %485 = vmatpush2.msra.mxu0 0.0
        %486 = vmatprep.subr.mxu0 0.0
        %487 = vmatpush2.msra.mxu0 0.0
        %488 = vmatprep.subr.mxu0 0.0
        %489 = vmatpush2.msra.mxu0 0.0
        %490 = vmatprep.subr.mxu0 0.0
        %491 = vmatpush2.msra.mxu0 0.0
        %492 = vmatprep.subr.mxu0 0.0
        %493 = vmatpush2.msra.mxu0 0.0
        %494 = vmatprep.subr.mxu0 0.0
        %495 = vmatpush2.msra.mxu0 0.0
        %496 = vmatprep.subr.mxu0 0.0
        %497 = vmatpush2.msra.mxu0 0.0
        %498 = vmatprep.subr.mxu0 0.0
        %499 = vmatpush2.msra.mxu0 0.0
        %500 = vmatprep.subr.mxu0 0.0
        %501 = vmatpush2.msra.mxu0 0.0
        %502 = vmatprep.subr.mxu0 0.0
        %503 = vmatpush2.msra.mxu0 0.0
        %504 = vmatprep.subr.mxu0 0.0
        %505 = vmatpush2.msra.mxu0 0.0
        %506 = vmatprep.subr.mxu0 0.0
        %507 = vmatpush2.msra.mxu0 0.0
        %508 = vmatprep.subr.mxu0 0.0
        %509 = vmatpush2.msra.mxu0 0.0
        %510 = vmatprep.subr.mxu0 0.0
        %511 = vmatpush2.msra.mxu0 0.0
        %512 = vmatprep.mubr.f32.mxu0 0.0
        %513 = vmatmul.mubr.f32.gmra.mxu0 %v401
        %v514 = vpop.f32.mrf.mxu0
        %v515 = vadd.f32 0.0, %v514
        %v516 = vpop.f32.mrf.mxu0
        %517 = vmatprep.mubr.f32.mxu0 0.0
        %518 = vmatmul.mubr.f32.gmra.mxu0 %v404
        %v519 = vpop.f32.mrf.mxu0
        %v520 = vadd.f32 0.0, %v519
        %v521 = vpop.f32.mrf.mxu0
        %522 = vmatprep.mubr.f32.mxu0 0.0
        %523 = vmatmul.mubr.f32.gmra.mxu0 %v407
        %v524 = vpop.f32.mrf.mxu0
        %v525 = vadd.f32 0.0, %v524
        %v526 = vpop.f32.mrf.mxu0
        %527 = vmatprep.mubr.f32.mxu0 0.0
        %528 = vmatmul.mubr.f32.gmra.mxu0 %v410
        %v529 = vpop.f32.mrf.mxu0
        %v530 = vadd.f32 0.0, %v529
        %v531 = vpop.f32.mrf.mxu0
        %532 = vmatprep.mubr.f32.mxu0 0.0
        %533 = vmatmul.mubr.f32.gmra.mxu0 %v413
        %v534 = vpop.f32.mrf.mxu0
        %v535 = vadd.f32 0.0, %v534
        %v536 = vpop.f32.mrf.mxu0
        %537 = vmatprep.mubr.f32.mxu0 0.0
        %538 = vmatmul.mubr.f32.gmra.mxu0 %v416
        %v539 = vpop.f32.mrf.mxu0
        %v540 = vadd.f32 0.0, %v539
        %v541 = vpop.f32.mrf.mxu0
        %542 = vmatprep.mubr.f32.mxu0 0.0
        %543 = vmatmul.mubr.f32.gmra.mxu0 %v419
        %v544 = vpop.f32.mrf.mxu0
        %v545 = vadd.f32 0.0, %v544
        %v546 = vpop.f32.mrf.mxu0
        %547 = vmatprep.mubr.f32.mxu0 0.0
        %548 = vmatmul.mubr.f32.gmra.mxu0 %v422
        %v549 = vpop.f32.mrf.mxu0
        %v550 = vadd.f32 0.0, %v549
        %v551 = vpop.f32.mrf.mxu0
        %552 = vmatprep.mubr.f32.mxu0 0.0
        %553 = vmatmul.mubr.f32.gmra.mxu0 %v425
        %v554 = vpop.f32.mrf.mxu0
        %v555 = vadd.f32 0.0, %v554
        %v556 = vpop.f32.mrf.mxu0
        %557 = vmatprep.mubr.f32.mxu0 0.0
        %558 = vmatmul.mubr.f32.gmra.mxu0 %v428
        %v559 = vpop.f32.mrf.mxu0
        %v560 = vadd.f32 0.0, %v559
        %v561 = vpop.f32.mrf.mxu0
        %562 = vmatprep.mubr.f32.mxu0 0.0
        %563 = vmatmul.mubr.f32.gmra.mxu0 %v431
        %v564 = vpop.f32.mrf.mxu0
        %v565 = vadd.f32 0.0, %v564
        %v566 = vpop.f32.mrf.mxu0
        %567 = vmatprep.mubr.f32.mxu0 0.0
        %568 = vmatmul.mubr.f32.gmra.mxu0 %v434
        %v569 = vpop.f32.mrf.mxu0
        %v570 = vadd.f32 0.0, %v569
        %v571 = vpop.f32.mrf.mxu0
        %572 = vmatprep.mubr.f32.mxu0 0.0
        %573 = vmatmul.mubr.f32.gmra.mxu0 %v437
        %v574 = vpop.f32.mrf.mxu0
        %v575 = vadd.f32 0.0, %v574
        %v576 = vpop.f32.mrf.mxu0
        %577 = vmatprep.mubr.f32.mxu0 0.0
        %578 = vmatmul.mubr.f32.gmra.mxu0 %v440
        %v579 = vpop.f32.mrf.mxu0
        %v580 = vadd.f32 0.0, %v579
        %v581 = vpop.f32.mrf.mxu0
        %582 = vmatprep.mubr.f32.mxu0 0.0
        %583 = vmatmul.mubr.f32.gmra.mxu0 %v443
        %v584 = vpop.f32.mrf.mxu0
        %v585 = vadd.f32 0.0, %v584
        %v586 = vpop.f32.mrf.mxu0
        %587 = vmatprep.mubr.f32.mxu0 0.0
        %588 = vmatmul.mubr.f32.gmra.mxu0 %v446
        %v589 = vpop.f32.mrf.mxu0
        %v590 = vadd.f32 0.0, %v589
        %v591 = vpop.f32.mrf.mxu0
        %592 = vdwg.mxu0
        %593 = vxpose.xlu0.b32.start [1/16] %v366, 128
        %594 = vxpose.xlu0.b32.cont [2/16] 0.0, 128
        %595 = vxpose.xlu0.b32.cont [3/16] 0.0, 128
        %596 = vxpose.xlu0.b32.cont [4/16] 0.0, 128
        %597 = vxpose.xlu0.b32.cont [5/16] 0.0, 128
        %598 = vxpose.xlu0.b32.cont [6/16] 0.0, 128
        %599 = vxpose.xlu0.b32.cont [7/16] 0.0, 128
        %600 = vxpose.xlu0.b32.cont [8/16] 0.0, 128
        %601 = vxpose.xlu0.b32.cont [9/16] 0.0, 128
        %602 = vxpose.xlu0.b32.cont [10/16] 0.0, 128
        %603 = vxpose.xlu0.b32.cont [11/16] 0.0, 128
        %604 = vxpose.xlu0.b32.cont [12/16] 0.0, 128
        %605 = vxpose.xlu0.b32.cont [13/16] 0.0, 128
        %606 = vxpose.xlu0.b32.cont [14/16] 0.0, 128
        %607 = vxpose.xlu0.b32.cont [15/16] 0.0, 128
        %608 = vxpose.xlu0.b32.end [16/16] 0.0, 128
        %v609 = vpop.trf.xlu0
        %v610 = vpop.trf.xlu0
        %v611 = vpop.trf.xlu0
        %v612 = vpop.trf.xlu0
        %v613 = vpop.trf.xlu0
        %v614 = vpop.trf.xlu0
        %v615 = vpop.trf.xlu0
        %v616 = vpop.trf.xlu0
        %v617 = vpop.trf.xlu0
        %v618 = vpop.trf.xlu0
        %v619 = vpop.trf.xlu0
        %v620 = vpop.trf.xlu0
        %v621 = vpop.trf.xlu0
        %v622 = vpop.trf.xlu0
        %v623 = vpop.trf.xlu0
        %v624 = vpop.trf.xlu0
        %v626 = vsel %vm399, %v609, 0
        %v629 = vsel %vm399, %v610, 0
        %v632 = vsel %vm399, %v611, 0
        %v635 = vsel %vm399, %v612, 0
        %v638 = vsel %vm399, %v613, 0
        %v641 = vsel %vm399, %v614, 0
        %v644 = vsel %vm399, %v615, 0
        %v647 = vsel %vm399, %v616, 0
        %v650 = vsel %vm399, %v617, 0
        %v653 = vsel %vm399, %v618, 0
        %v656 = vsel %vm399, %v619, 0
        %v659 = vsel %vm399, %v620, 0
        %v662 = vsel %vm399, %v621, 0
        %v665 = vsel %vm399, %v622, 0
        %v668 = vsel %vm399, %v623, 0
        %v671 = vsel %vm399, %v624, 0
        %673 = vmatprep.subr.mxu0 0.0
        %674 = vmatpush1.msra.mxu0 0.0
        %675 = vmatprep.subr.mxu0 0.0
        %676 = vmatpush1.msra.mxu0 0.0
        %677 = vmatprep.subr.mxu0 0.0
        %678 = vmatpush1.msra.mxu0 0.0
        %679 = vmatprep.subr.mxu0 0.0
        %680 = vmatpush1.msra.mxu0 0.0
        %681 = vmatprep.subr.mxu0 0.0
        %682 = vmatpush1.msra.mxu0 0.0
        %683 = vmatprep.subr.mxu0 0.0
        %684 = vmatpush1.msra.mxu0 0.0
        %685 = vmatprep.subr.mxu0 0.0
        %686 = vmatpush1.msra.mxu0 0.0
        %687 = vmatprep.subr.mxu0 0.0
        %688 = vmatpush1.msra.mxu0 0.0
        %689 = vmatprep.subr.mxu0 0.0
        %690 = vmatpush1.msra.mxu0 0.0
        %691 = vmatprep.subr.mxu0 0.0
        %692 = vmatpush1.msra.mxu0 0.0
        %693 = vmatprep.subr.mxu0 0.0
        %694 = vmatpush1.msra.mxu0 0.0
        %695 = vmatprep.subr.mxu0 0.0
        %696 = vmatpush1.msra.mxu0 0.0
        %697 = vmatprep.subr.mxu0 0.0
        %698 = vmatpush1.msra.mxu0 0.0
        %699 = vmatprep.subr.mxu0 0.0
        %700 = vmatpush1.msra.mxu0 0.0
        %701 = vmatprep.subr.mxu0 0.0
        %702 = vmatpush1.msra.mxu0 0.0
        %703 = vmatprep.subr.mxu0 0.0
        %704 = vmatpush1.msra.mxu0 %v366
        %705 = vmatprep.subr.mxu0 0.0
        %706 = vmatpush2.msra.mxu0 0.0
        %707 = vmatprep.subr.mxu0 0.0
        %708 = vmatpush2.msra.mxu0 0.0
        %709 = vmatprep.subr.mxu0 0.0
        %710 = vmatpush2.msra.mxu0 0.0
        %711 = vmatprep.subr.mxu0 0.0
        %712 = vmatpush2.msra.mxu0 0.0
        %713 = vmatprep.subr.mxu0 0.0
        %714 = vmatpush2.msra.mxu0 0.0
        %715 = vmatprep.subr.mxu0 0.0
        %716 = vmatpush2.msra.mxu0 0.0
        %717 = vmatprep.subr.mxu0 0.0
        %718 = vmatpush2.msra.mxu0 0.0
        %719 = vmatprep.subr.mxu0 0.0
        %720 = vmatpush2.msra.mxu0 0.0
        %721 = vmatprep.subr.mxu0 0.0
        %722 = vmatpush2.msra.mxu0 0.0
        %723 = vmatprep.subr.mxu0 0.0
        %724 = vmatpush2.msra.mxu0 0.0
        %725 = vmatprep.subr.mxu0 0.0
        %726 = vmatpush2.msra.mxu0 0.0
        %727 = vmatprep.subr.mxu0 0.0
        %728 = vmatpush2.msra.mxu0 0.0
        %729 = vmatprep.subr.mxu0 0.0
        %730 = vmatpush2.msra.mxu0 0.0
        %731 = vmatprep.subr.mxu0 0.0
        %732 = vmatpush2.msra.mxu0 0.0
        %733 = vmatprep.subr.mxu0 0.0
        %734 = vmatpush2.msra.mxu0 0.0
        %735 = vmatprep.subr.mxu0 0.0
        %736 = vmatpush2.msra.mxu0 0.0
        %737 = vmatprep.mubr.f32.mxu0 0.0
        %738 = vmatmul.mubr.f32.gmra.mxu0 %v626
        %v739 = vpop.f32.mrf.mxu0
        %v740 = vadd.f32 0.0, %v739
        %v741 = vpop.f32.mrf.mxu0
        %742 = vmatprep.mubr.f32.mxu0 0.0
        %743 = vmatmul.mubr.f32.gmra.mxu0 %v629
        %v744 = vpop.f32.mrf.mxu0
        %v745 = vadd.f32 0.0, %v744
        %v746 = vpop.f32.mrf.mxu0
        %747 = vmatprep.mubr.f32.mxu0 0.0
        %748 = vmatmul.mubr.f32.gmra.mxu0 %v632
        %v749 = vpop.f32.mrf.mxu0
        %v750 = vadd.f32 0.0, %v749
        %v751 = vpop.f32.mrf.mxu0
        %752 = vmatprep.mubr.f32.mxu0 0.0
        %753 = vmatmul.mubr.f32.gmra.mxu0 %v635
        %v754 = vpop.f32.mrf.mxu0
        %v755 = vadd.f32 0.0, %v754
        %v756 = vpop.f32.mrf.mxu0
        %757 = vmatprep.mubr.f32.mxu0 0.0
        %758 = vmatmul.mubr.f32.gmra.mxu0 %v638
        %v759 = vpop.f32.mrf.mxu0
        %v760 = vadd.f32 0.0, %v759
        %v761 = vpop.f32.mrf.mxu0
        %762 = vmatprep.mubr.f32.mxu0 0.0
        %763 = vmatmul.mubr.f32.gmra.mxu0 %v641
        %v764 = vpop.f32.mrf.mxu0
        %v765 = vadd.f32 0.0, %v764
        %v766 = vpop.f32.mrf.mxu0
        %767 = vmatprep.mubr.f32.mxu0 0.0
        %768 = vmatmul.mubr.f32.gmra.mxu0 %v644
        %v769 = vpop.f32.mrf.mxu0
        %v770 = vadd.f32 0.0, %v769
        %v771 = vpop.f32.mrf.mxu0
        %772 = vmatprep.mubr.f32.mxu0 0.0
        %773 = vmatmul.mubr.f32.gmra.mxu0 %v647
        %v774 = vpop.f32.mrf.mxu0
        %v775 = vadd.f32 0.0, %v774
        %v776 = vpop.f32.mrf.mxu0
        %777 = vmatprep.mubr.f32.mxu0 0.0
        %778 = vmatmul.mubr.f32.gmra.mxu0 %v650
        %v779 = vpop.f32.mrf.mxu0
        %v780 = vadd.f32 0.0, %v779
        %v781 = vpop.f32.mrf.mxu0
        %782 = vmatprep.mubr.f32.mxu0 0.0
        %783 = vmatmul.mubr.f32.gmra.mxu0 %v653
        %v784 = vpop.f32.mrf.mxu0
        %v785 = vadd.f32 0.0, %v784
        %v786 = vpop.f32.mrf.mxu0
        %787 = vmatprep.mubr.f32.mxu0 0.0
        %788 = vmatmul.mubr.f32.gmra.mxu0 %v656
        %v789 = vpop.f32.mrf.mxu0
        %v790 = vadd.f32 0.0, %v789
        %v791 = vpop.f32.mrf.mxu0
        %792 = vmatprep.mubr.f32.mxu0 0.0
        %793 = vmatmul.mubr.f32.gmra.mxu0 %v659
        %v794 = vpop.f32.mrf.mxu0
        %v795 = vadd.f32 0.0, %v794
        %v796 = vpop.f32.mrf.mxu0
        %797 = vmatprep.mubr.f32.mxu0 0.0
        %798 = vmatmul.mubr.f32.gmra.mxu0 %v662
        %v799 = vpop.f32.mrf.mxu0
        %v800 = vadd.f32 0.0, %v799
        %v801 = vpop.f32.mrf.mxu0
        %802 = vmatprep.mubr.f32.mxu0 0.0
        %803 = vmatmul.mubr.f32.gmra.mxu0 %v665
        %v804 = vpop.f32.mrf.mxu0
        %v805 = vadd.f32 0.0, %v804
        %v806 = vpop.f32.mrf.mxu0
        %807 = vmatprep.mubr.f32.mxu0 0.0
        %808 = vmatmul.mubr.f32.gmra.mxu0 %v668
        %v809 = vpop.f32.mrf.mxu0
        %v810 = vadd.f32 0.0, %v809
        %v811 = vpop.f32.mrf.mxu0
        %812 = vmatprep.mubr.f32.mxu0 0.0
        %813 = vmatmul.mubr.f32.gmra.mxu0 %v671
        %v814 = vpop.f32.mrf.mxu0
        %v815 = vadd.f32 0.0, %v814
        %v816 = vpop.f32.mrf.mxu0
        %817 = vdwg.mxu0
        %s818 = scalar_lea.vmem %s168, 256
        %v819 = vld [vmem:[%s818] sm:$0xff]
        %v820 = vld [vmem:[%s818 + $0x8] sm:$0xff]
        %v821 = vld [vmem:[%s818 + $0x10] sm:$0xff]
        %v822 = vld [vmem:[%s818 + $0x18] sm:$0xff]
        %v823 = vld [vmem:[%s818 + $0x20] sm:$0xff]
        %v824 = vld [vmem:[%s818 + $0x28] sm:$0xff]
        %v825 = vld [vmem:[%s818 + $0x30] sm:$0xff]
        %v826 = vld [vmem:[%s818 + $0x38] sm:$0xff]
        %v827 = vld [vmem:[%s818 + $0x40] sm:$0xff]
        %v828 = vld [vmem:[%s818 + $0x48] sm:$0xff]
        %v829 = vld [vmem:[%s818 + $0x50] sm:$0xff]
        %v830 = vld [vmem:[%s818 + $0x58] sm:$0xff]
        %v831 = vld [vmem:[%s818 + $0x60] sm:$0xff]
        %v832 = vld [vmem:[%s818 + $0x68] sm:$0xff]
        %v833 = vld [vmem:[%s818 + $0x70] sm:$0xff]
        %v834 = vld [vmem:[%s818 + $0x78] sm:$0xff]
        %835 = vmatprep.subr.mxu0 0.0
        %836 = vmatpush1.msra.mxu0 %v834
        %837 = vmatprep.subr.mxu0 0.0
        %838 = vmatpush1.msra.mxu0 %v833
        %839 = vmatprep.subr.mxu0 0.0
        %840 = vmatpush1.msra.mxu0 %v832
        %841 = vmatprep.subr.mxu0 0.0
        %842 = vmatpush1.msra.mxu0 %v831
        %843 = vmatprep.subr.mxu0 0.0
        %844 = vmatpush1.msra.mxu0 %v830
        %845 = vmatprep.subr.mxu0 0.0
        %846 = vmatpush1.msra.mxu0 %v829
        %847 = vmatprep.subr.mxu0 0.0
        %848 = vmatpush1.msra.mxu0 %v828
        %849 = vmatprep.subr.mxu0 0.0
        %850 = vmatpush1.msra.mxu0 %v827
        %851 = vmatprep.subr.mxu0 0.0
        %852 = vmatpush1.msra.mxu0 %v826
        %853 = vmatprep.subr.mxu0 0.0
        %854 = vmatpush1.msra.mxu0 %v825
        %855 = vmatprep.subr.mxu0 0.0
        %856 = vmatpush1.msra.mxu0 %v824
        %857 = vmatprep.subr.mxu0 0.0
        %858 = vmatpush1.msra.mxu0 %v823
        %859 = vmatprep.subr.mxu0 0.0
        %860 = vmatpush1.msra.mxu0 %v822
        %861 = vmatprep.subr.mxu0 0.0
        %862 = vmatpush1.msra.mxu0 %v821
        %863 = vmatprep.subr.mxu0 0.0
        %864 = vmatpush1.msra.mxu0 %v820
        %865 = vmatprep.subr.mxu0 0.0
        %866 = vmatpush1.msra.mxu0 %v819
        %867 = vmatprep.subr.mxu0 0.0
        %868 = vmatpush2.msra.mxu0 0.0
        %869 = vmatprep.subr.mxu0 0.0
        %870 = vmatpush2.msra.mxu0 0.0
        %871 = vmatprep.subr.mxu0 0.0
        %872 = vmatpush2.msra.mxu0 0.0
        %873 = vmatprep.subr.mxu0 0.0
        %874 = vmatpush2.msra.mxu0 0.0
        %875 = vmatprep.subr.mxu0 0.0
        %876 = vmatpush2.msra.mxu0 0.0
        %877 = vmatprep.subr.mxu0 0.0
        %878 = vmatpush2.msra.mxu0 0.0
        %879 = vmatprep.subr.mxu0 0.0
        %880 = vmatpush2.msra.mxu0 0.0
        %881 = vmatprep.subr.mxu0 0.0
        %882 = vmatpush2.msra.mxu0 0.0
        %883 = vmatprep.subr.mxu0 0.0
        %884 = vmatpush2.msra.mxu0 0.0
        %885 = vmatprep.subr.mxu0 0.0
        %886 = vmatpush2.msra.mxu0 0.0
        %887 = vmatprep.subr.mxu0 0.0
        %888 = vmatpush2.msra.mxu0 0.0
        %889 = vmatprep.subr.mxu0 0.0
        %890 = vmatpush2.msra.mxu0 0.0
        %891 = vmatprep.subr.mxu0 0.0
        %892 = vmatpush2.msra.mxu0 0.0
        %893 = vmatprep.subr.mxu0 0.0
        %894 = vmatpush2.msra.mxu0 0.0
        %895 = vmatprep.subr.mxu0 0.0
        %896 = vmatpush2.msra.mxu0 0.0
        %897 = vmatprep.subr.mxu0 0.0
        %898 = vmatpush2.msra.mxu0 0.0
        %899 = vmatprep.mubr.f32.mxu0 0.0
        %900 = vmatmul.mubr.f32.gmra.mxu0 %v178
        %v901 = vpop.f32.mrf.mxu0
        %v902 = vadd.f32 0.0, %v901
        %v903 = vpop.f32.mrf.mxu0
        %904 = vmatprep.mubr.f32.mxu0 0.0
        %905 = vmatmul.mubr.f32.gmra.mxu0 %v179
        %v906 = vpop.f32.mrf.mxu0
        %v907 = vadd.f32 0.0, %v906
        %v908 = vpop.f32.mrf.mxu0
        %909 = vdwg.mxu0
        %v910 = vmax.f32 %v902, 0.0
        %v911 = vmax.f32 %v907, 0.0
        %s912 = scalar_lea.vmem %s168, 384
        %v913 = vld [vmem:[%s912] sm:$0xff]
        %v914 = vld [vmem:[%s912 + $0x8] sm:$0xff]
        %v915 = vld [vmem:[%s912 + $0x10] sm:$0xff]
        %v916 = vld [vmem:[%s912 + $0x18] sm:$0xff]
        %v917 = vld [vmem:[%s912 + $0x20] sm:$0xff]
        %v918 = vld [vmem:[%s912 + $0x28] sm:$0xff]
        %v919 = vld [vmem:[%s912 + $0x30] sm:$0xff]
        %v920 = vld [vmem:[%s912 + $0x38] sm:$0xff]
        %v921 = vld [vmem:[%s912 + $0x40] sm:$0xff]
        %v922 = vld [vmem:[%s912 + $0x48] sm:$0xff]
        %v923 = vld [vmem:[%s912 + $0x50] sm:$0xff]
        %v924 = vld [vmem:[%s912 + $0x58] sm:$0xff]
        %v925 = vld [vmem:[%s912 + $0x60] sm:$0xff]
        %v926 = vld [vmem:[%s912 + $0x68] sm:$0xff]
        %v927 = vld [vmem:[%s912 + $0x70] sm:$0xff]
        %v928 = vld [vmem:[%s912 + $0x78] sm:$0xff]
        %929 = vmatprep.subr.mxu0 0.0
        %930 = vmatpush1.msra.mxu0 %v928
        %931 = vmatprep.subr.mxu0 0.0
        %932 = vmatpush1.msra.mxu0 %v927
        %933 = vmatprep.subr.mxu0 0.0
        %934 = vmatpush1.msra.mxu0 %v926
        %935 = vmatprep.subr.mxu0 0.0
        %936 = vmatpush1.msra.mxu0 %v925
        %937 = vmatprep.subr.mxu0 0.0
        %938 = vmatpush1.msra.mxu0 %v924
        %939 = vmatprep.subr.mxu0 0.0
        %940 = vmatpush1.msra.mxu0 %v923
        %941 = vmatprep.subr.mxu0 0.0
        %942 = vmatpush1.msra.mxu0 %v922
        %943 = vmatprep.subr.mxu0 0.0
        %944 = vmatpush1.msra.mxu0 %v921
        %945 = vmatprep.subr.mxu0 0.0
        %946 = vmatpush1.msra.mxu0 %v920
        %947 = vmatprep.subr.mxu0 0.0
        %948 = vmatpush1.msra.mxu0 %v919
        %949 = vmatprep.subr.mxu0 0.0
        %950 = vmatpush1.msra.mxu0 %v918
        %951 = vmatprep.subr.mxu0 0.0
        %952 = vmatpush1.msra.mxu0 %v917
        %953 = vmatprep.subr.mxu0 0.0
        %954 = vmatpush1.msra.mxu0 %v916
        %955 = vmatprep.subr.mxu0 0.0
        %956 = vmatpush1.msra.mxu0 %v915
        %957 = vmatprep.subr.mxu0 0.0
        %958 = vmatpush1.msra.mxu0 %v914
        %959 = vmatprep.subr.mxu0 0.0
        %960 = vmatpush1.msra.mxu0 %v913
        %961 = vmatprep.subr.mxu0 0.0
        %962 = vmatpush2.msra.mxu0 0.0
        %963 = vmatprep.subr.mxu0 0.0
        %964 = vmatpush2.msra.mxu0 0.0
        %965 = vmatprep.subr.mxu0 0.0
        %966 = vmatpush2.msra.mxu0 0.0
        %967 = vmatprep.subr.mxu0 0.0
        %968 = vmatpush2.msra.mxu0 0.0
        %969 = vmatprep.subr.mxu0 0.0
        %970 = vmatpush2.msra.mxu0 0.0
        %971 = vmatprep.subr.mxu0 0.0
        %972 = vmatpush2.msra.mxu0 0.0
        %973 = vmatprep.subr.mxu0 0.0
        %974 = vmatpush2.msra.mxu0 0.0
        %975 = vmatprep.subr.mxu0 0.0
        %976 = vmatpush2.msra.mxu0 0.0
        %977 = vmatprep.subr.mxu0 0.0
        %978 = vmatpush2.msra.mxu0 0.0
        %979 = vmatprep.subr.mxu0 0.0
        %980 = vmatpush2.msra.mxu0 0.0
        %981 = vmatprep.subr.mxu0 0.0
        %982 = vmatpush2.msra.mxu0 0.0
        %983 = vmatprep.subr.mxu0 0.0
        %984 = vmatpush2.msra.mxu0 0.0
        %985 = vmatprep.subr.mxu0 0.0
        %986 = vmatpush2.msra.mxu0 0.0
        %987 = vmatprep.subr.mxu0 0.0
        %988 = vmatpush2.msra.mxu0 0.0
        %989 = vmatprep.subr.mxu0 0.0
        %990 = vmatpush2.msra.mxu0 0.0
        %991 = vmatprep.subr.mxu0 0.0
        %992 = vmatpush2.msra.mxu0 0.0
        %993 = vmatprep.mubr.f32.mxu0 0.0
        %994 = vmatmul.mubr.f32.gmra.mxu0 %v910
        %v995 = vpop.f32.mrf.mxu0
        %v996 = vadd.f32 0.0, %v995
        %v997 = vpop.f32.mrf.mxu0
        %998 = vmatprep.mubr.f32.mxu0 0.0
        %999 = vmatmul.mubr.f32.gmra.mxu0 %v911
        %v1000 = vpop.f32.mrf.mxu0
        %v1001 = vadd.f32 0.0, %v1000
        %v1002 = vpop.f32.mrf.mxu0
        %1003 = vdwg.mxu0
        %v1004 = vmax.f32 %v996, 0.0
        %v1005 = vmax.f32 %v1001, 0.0
        %1006 = vmatprep.subr.mxu0 0.0
        %1007 = vmatpush1.msra.mxu0 %v590
        %1008 = vmatprep.subr.mxu0 0.0
        %1009 = vmatpush1.msra.mxu0 %v585
        %1010 = vmatprep.subr.mxu0 0.0
        %1011 = vmatpush1.msra.mxu0 %v580
        %1012 = vmatprep.subr.mxu0 0.0
        %1013 = vmatpush1.msra.mxu0 %v575
        %1014 = vmatprep.subr.mxu0 0.0
        %1015 = vmatpush1.msra.mxu0 %v570
        %1016 = vmatprep.subr.mxu0 0.0
        %1017 = vmatpush1.msra.mxu0 %v565
        %1018 = vmatprep.subr.mxu0 0.0
        %1019 = vmatpush1.msra.mxu0 %v560
        %1020 = vmatprep.subr.mxu0 0.0
        %1021 = vmatpush1.msra.mxu0 %v555
        %1022 = vmatprep.subr.mxu0 0.0
        %1023 = vmatpush1.msra.mxu0 %v550
        %1024 = vmatprep.subr.mxu0 0.0
        %1025 = vmatpush1.msra.mxu0 %v545
        %1026 = vmatprep.subr.mxu0 0.0
        %1027 = vmatpush1.msra.mxu0 %v540
        %1028 = vmatprep.subr.mxu0 0.0
        %1029 = vmatpush1.msra.mxu0 %v535
        %1030 = vmatprep.subr.mxu0 0.0
        %1031 = vmatpush1.msra.mxu0 %v530
        %1032 = vmatprep.subr.mxu0 0.0
        %1033 = vmatpush1.msra.mxu0 %v525
        %1034 = vmatprep.subr.mxu0 0.0
        %1035 = vmatpush1.msra.mxu0 %v520
        %1036 = vmatprep.subr.mxu0 0.0
        %1037 = vmatpush1.msra.mxu0 %v515
        %1038 = vmatprep.subr.mxu0 0.0
        %1039 = vmatpush2.msra.mxu0 0.0
        %1040 = vmatprep.subr.mxu0 0.0
        %1041 = vmatpush2.msra.mxu0 0.0
        %1042 = vmatprep.subr.mxu0 0.0
        %1043 = vmatpush2.msra.mxu0 0.0
        %1044 = vmatprep.subr.mxu0 0.0
        %1045 = vmatpush2.msra.mxu0 0.0
        %1046 = vmatprep.subr.mxu0 0.0
        %1047 = vmatpush2.msra.mxu0 0.0
        %1048 = vmatprep.subr.mxu0 0.0
        %1049 = vmatpush2.msra.mxu0 0.0
        %1050 = vmatprep.subr.mxu0 0.0
        %1051 = vmatpush2.msra.mxu0 0.0
        %1052 = vmatprep.subr.mxu0 0.0
        %1053 = vmatpush2.msra.mxu0 0.0
        %1054 = vmatprep.subr.mxu0 0.0
        %1055 = vmatpush2.msra.mxu0 0.0
        %1056 = vmatprep.subr.mxu0 0.0
        %1057 = vmatpush2.msra.mxu0 0.0
        %1058 = vmatprep.subr.mxu0 0.0
        %1059 = vmatpush2.msra.mxu0 0.0
        %1060 = vmatprep.subr.mxu0 0.0
        %1061 = vmatpush2.msra.mxu0 0.0
        %1062 = vmatprep.subr.mxu0 0.0
        %1063 = vmatpush2.msra.mxu0 0.0
        %1064 = vmatprep.subr.mxu0 0.0
        %1065 = vmatpush2.msra.mxu0 0.0
        %1066 = vmatprep.subr.mxu0 0.0
        %1067 = vmatpush2.msra.mxu0 0.0
        %1068 = vmatprep.subr.mxu0 0.0
        %1069 = vmatpush2.msra.mxu0 0.0
        %1070 = vmatprep.mubr.f32.mxu0 0.0
        %1071 = vmatmul.mubr.f32.gmra.mxu0 %v1004
        %v1072 = vpop.f32.mrf.mxu0
        %v1073 = vadd.f32 0.0, %v1072
        %v1074 = vpop.f32.mrf.mxu0
        %1075 = vdwg.mxu0
        %1076 = vmatprep.subr.mxu0 0.0
        %1077 = vmatpush1.msra.mxu0 %v815
        %1078 = vmatprep.subr.mxu0 0.0
        %1079 = vmatpush1.msra.mxu0 %v810
        %1080 = vmatprep.subr.mxu0 0.0
        %1081 = vmatpush1.msra.mxu0 %v805
        %1082 = vmatprep.subr.mxu0 0.0
        %1083 = vmatpush1.msra.mxu0 %v800
        %1084 = vmatprep.subr.mxu0 0.0
        %1085 = vmatpush1.msra.mxu0 %v795
        %1086 = vmatprep.subr.mxu0 0.0
        %1087 = vmatpush1.msra.mxu0 %v790
        %1088 = vmatprep.subr.mxu0 0.0
        %1089 = vmatpush1.msra.mxu0 %v785
        %1090 = vmatprep.subr.mxu0 0.0
        %1091 = vmatpush1.msra.mxu0 %v780
        %1092 = vmatprep.subr.mxu0 0.0
        %1093 = vmatpush1.msra.mxu0 %v775
        %1094 = vmatprep.subr.mxu0 0.0
        %1095 = vmatpush1.msra.mxu0 %v770
        %1096 = vmatprep.subr.mxu0 0.0
        %1097 = vmatpush1.msra.mxu0 %v765
        %1098 = vmatprep.subr.mxu0 0.0
        %1099 = vmatpush1.msra.mxu0 %v760
        %1100 = vmatprep.subr.mxu0 0.0
        %1101 = vmatpush1.msra.mxu0 %v755
        %1102 = vmatprep.subr.mxu0 0.0
        %1103 = vmatpush1.msra.mxu0 %v750
        %1104 = vmatprep.subr.mxu0 0.0
        %1105 = vmatpush1.msra.mxu0 %v745
        %1106 = vmatprep.subr.mxu0 0.0
        %1107 = vmatpush1.msra.mxu0 %v740
        %1108 = vmatprep.subr.mxu0 0.0
        %1109 = vmatpush2.msra.mxu0 0.0
        %1110 = vmatprep.subr.mxu0 0.0
        %1111 = vmatpush2.msra.mxu0 0.0
        %1112 = vmatprep.subr.mxu0 0.0
        %1113 = vmatpush2.msra.mxu0 0.0
        %1114 = vmatprep.subr.mxu0 0.0
        %1115 = vmatpush2.msra.mxu0 0.0
        %1116 = vmatprep.subr.mxu0 0.0
        %1117 = vmatpush2.msra.mxu0 0.0
        %1118 = vmatprep.subr.mxu0 0.0
        %1119 = vmatpush2.msra.mxu0 0.0
        %1120 = vmatprep.subr.mxu0 0.0
        %1121 = vmatpush2.msra.mxu0 0.0
        %1122 = vmatprep.subr.mxu0 0.0
        %1123 = vmatpush2.msra.mxu0 0.0
        %1124 = vmatprep.subr.mxu0 0.0
        %1125 = vmatpush2.msra.mxu0 0.0
        %1126 = vmatprep.subr.mxu0 0.0
        %1127 = vmatpush2.msra.mxu0 0.0
        %1128 = vmatprep.subr.mxu0 0.0
        %1129 = vmatpush2.msra.mxu0 0.0
        %1130 = vmatprep.subr.mxu0 0.0
        %1131 = vmatpush2.msra.mxu0 0.0
        %1132 = vmatprep.subr.mxu0 0.0
        %1133 = vmatpush2.msra.mxu0 0.0
        %1134 = vmatprep.subr.mxu0 0.0
        %1135 = vmatpush2.msra.mxu0 0.0
        %1136 = vmatprep.subr.mxu0 0.0
        %1137 = vmatpush2.msra.mxu0 0.0
        %1138 = vmatprep.subr.mxu0 0.0
        %1139 = vmatpush2.msra.mxu0 0.0
        %1140 = vmatprep.mubr.f32.mxu0 0.0
        %1141 = vmatmul.mubr.f32.gmra.mxu0 %v1005
        %v1142 = vpop.f32.mrf.mxu0
        %v1143 = vadd.f32 0.0, %v1142
        %v1144 = vpop.f32.mrf.mxu0
        %1145 = vdwg.mxu0
        %s1146 = scalar_lea.vmem %s168, 512
        %v1147 = vld [vmem:[%s1146] sm:$0xff]
        %v1148 = vld [vmem:[%s1146 + $0x8] sm:$0xff]
        %v1149 = vld [vmem:[%s1146 + $0x10] sm:$0xff]
        %v1150 = vld [vmem:[%s1146 + $0x18] sm:$0xff]
        %v1151 = vld [vmem:[%s1146 + $0x20] sm:$0xff]
        %v1152 = vld [vmem:[%s1146 + $0x28] sm:$0xff]
        %v1153 = vld [vmem:[%s1146 + $0x30] sm:$0xff]
        %v1154 = vld [vmem:[%s1146 + $0x38] sm:$0xff]
        %v1155 = vld [vmem:[%s1146 + $0x40] sm:$0xff]
        %v1156 = vld [vmem:[%s1146 + $0x48] sm:$0xff]
        %v1157 = vld [vmem:[%s1146 + $0x50] sm:$0xff]
        %v1158 = vld [vmem:[%s1146 + $0x58] sm:$0xff]
        %v1159 = vld [vmem:[%s1146 + $0x60] sm:$0xff]
        %v1160 = vld [vmem:[%s1146 + $0x68] sm:$0xff]
        %v1161 = vld [vmem:[%s1146 + $0x70] sm:$0xff]
        %v1162 = vld [vmem:[%s1146 + $0x78] sm:$0xff]
        %1163 = vmatprep.subr.mxu0 0.0
        %1164 = vmatpush1.msra.mxu0 %v1162
        %1165 = vmatprep.subr.mxu0 0.0
        %1166 = vmatpush1.msra.mxu0 %v1161
        %1167 = vmatprep.subr.mxu0 0.0
        %1168 = vmatpush1.msra.mxu0 %v1160
        %1169 = vmatprep.subr.mxu0 0.0
        %1170 = vmatpush1.msra.mxu0 %v1159
        %1171 = vmatprep.subr.mxu0 0.0
        %1172 = vmatpush1.msra.mxu0 %v1158
        %1173 = vmatprep.subr.mxu0 0.0
        %1174 = vmatpush1.msra.mxu0 %v1157
        %1175 = vmatprep.subr.mxu0 0.0
        %1176 = vmatpush1.msra.mxu0 %v1156
        %1177 = vmatprep.subr.mxu0 0.0
        %1178 = vmatpush1.msra.mxu0 %v1155
        %1179 = vmatprep.subr.mxu0 0.0
        %1180 = vmatpush1.msra.mxu0 %v1154
        %1181 = vmatprep.subr.mxu0 0.0
        %1182 = vmatpush1.msra.mxu0 %v1153
        %1183 = vmatprep.subr.mxu0 0.0
        %1184 = vmatpush1.msra.mxu0 %v1152
        %1185 = vmatprep.subr.mxu0 0.0
        %1186 = vmatpush1.msra.mxu0 %v1151
        %1187 = vmatprep.subr.mxu0 0.0
        %1188 = vmatpush1.msra.mxu0 %v1150
        %1189 = vmatprep.subr.mxu0 0.0
        %1190 = vmatpush1.msra.mxu0 %v1149
        %1191 = vmatprep.subr.mxu0 0.0
        %1192 = vmatpush1.msra.mxu0 %v1148
        %1193 = vmatprep.subr.mxu0 0.0
        %1194 = vmatpush1.msra.mxu0 %v1147
        %1195 = vmatprep.subr.mxu0 0.0
        %1196 = vmatpush2.msra.mxu0 0.0
        %1197 = vmatprep.subr.mxu0 0.0
        %1198 = vmatpush2.msra.mxu0 0.0
        %1199 = vmatprep.subr.mxu0 0.0
        %1200 = vmatpush2.msra.mxu0 0.0
        %1201 = vmatprep.subr.mxu0 0.0
        %1202 = vmatpush2.msra.mxu0 0.0
        %1203 = vmatprep.subr.mxu0 0.0
        %1204 = vmatpush2.msra.mxu0 0.0
        %1205 = vmatprep.subr.mxu0 0.0
        %1206 = vmatpush2.msra.mxu0 0.0
        %1207 = vmatprep.subr.mxu0 0.0
        %1208 = vmatpush2.msra.mxu0 0.0
        %1209 = vmatprep.subr.mxu0 0.0
        %1210 = vmatpush2.msra.mxu0 0.0
        %1211 = vmatprep.subr.mxu0 0.0
        %1212 = vmatpush2.msra.mxu0 0.0
        %1213 = vmatprep.subr.mxu0 0.0
        %1214 = vmatpush2.msra.mxu0 0.0
        %1215 = vmatprep.subr.mxu0 0.0
        %1216 = vmatpush2.msra.mxu0 0.0
        %1217 = vmatprep.subr.mxu0 0.0
        %1218 = vmatpush2.msra.mxu0 0.0
        %1219 = vmatprep.subr.mxu0 0.0
        %1220 = vmatpush2.msra.mxu0 0.0
        %1221 = vmatprep.subr.mxu0 0.0
        %1222 = vmatpush2.msra.mxu0 0.0
        %1223 = vmatprep.subr.mxu0 0.0
        %1224 = vmatpush2.msra.mxu0 0.0
        %1225 = vmatprep.subr.mxu0 0.0
        %1226 = vmatpush2.msra.mxu0 0.0
        %1227 = vmatprep.mubr.f32.mxu0 0.0
        %1228 = vmatmul.mubr.f32.gmra.mxu0 %v1073
        %v1229 = vpop.f32.mrf.mxu0
        %v1230 = vadd.f32 0.0, %v1229
        %v1231 = vpop.f32.mrf.mxu0
        %1232 = vmatprep.mubr.f32.mxu0 0.0
        %1233 = vmatmul.mubr.f32.gmra.mxu0 %v1143
        %v1234 = vpop.f32.mrf.mxu0
        %v1235 = vadd.f32 0.0, %v1234
        %v1236 = vpop.f32.mrf.mxu0
        %1237 = vdwg.mxu0
        %v1238 = vmax.f32 %v1230, 0.0
        %v1239 = vmax.f32 %v1235, 0.0
        %s1240 = scalar_lea.vmem %s168, 640
        %v1241 = vld [vmem:[%s1240] sm:$0xff]
        %v1242 = vld [vmem:[%s1240 + $0x8] sm:$0xff]
        %v1243 = vld [vmem:[%s1240 + $0x10] sm:$0xff]
        %v1244 = vld [vmem:[%s1240 + $0x18] sm:$0xff]
        %v1245 = vld [vmem:[%s1240 + $0x20] sm:$0xff]
        %v1246 = vld [vmem:[%s1240 + $0x28] sm:$0xff]
        %v1247 = vld [vmem:[%s1240 + $0x30] sm:$0xff]
        %v1248 = vld [vmem:[%s1240 + $0x38] sm:$0xff]
        %v1249 = vld [vmem:[%s1240 + $0x40] sm:$0xff]
        %v1250 = vld [vmem:[%s1240 + $0x48] sm:$0xff]
        %v1251 = vld [vmem:[%s1240 + $0x50] sm:$0xff]
        %v1252 = vld [vmem:[%s1240 + $0x58] sm:$0xff]
        %v1253 = vld [vmem:[%s1240 + $0x60] sm:$0xff]
        %v1254 = vld [vmem:[%s1240 + $0x68] sm:$0xff]
        %v1255 = vld [vmem:[%s1240 + $0x70] sm:$0xff]
        %v1256 = vld [vmem:[%s1240 + $0x78] sm:$0xff]
        %1257 = vmatprep.subr.mxu0 0.0
        %1258 = vmatpush1.msra.mxu0 %v1256
        %1259 = vmatprep.subr.mxu0 0.0
        %1260 = vmatpush1.msra.mxu0 %v1255
        %1261 = vmatprep.subr.mxu0 0.0
        %1262 = vmatpush1.msra.mxu0 %v1254
        %1263 = vmatprep.subr.mxu0 0.0
        %1264 = vmatpush1.msra.mxu0 %v1253
        %1265 = vmatprep.subr.mxu0 0.0
        %1266 = vmatpush1.msra.mxu0 %v1252
        %1267 = vmatprep.subr.mxu0 0.0
        %1268 = vmatpush1.msra.mxu0 %v1251
        %1269 = vmatprep.subr.mxu0 0.0
        %1270 = vmatpush1.msra.mxu0 %v1250
        %1271 = vmatprep.subr.mxu0 0.0
        %1272 = vmatpush1.msra.mxu0 %v1249
        %1273 = vmatprep.subr.mxu0 0.0
        %1274 = vmatpush1.msra.mxu0 %v1248
        %1275 = vmatprep.subr.mxu0 0.0
        %1276 = vmatpush1.msra.mxu0 %v1247
        %1277 = vmatprep.subr.mxu0 0.0
        %1278 = vmatpush1.msra.mxu0 %v1246
        %1279 = vmatprep.subr.mxu0 0.0
        %1280 = vmatpush1.msra.mxu0 %v1245
        %1281 = vmatprep.subr.mxu0 0.0
        %1282 = vmatpush1.msra.mxu0 %v1244
        %1283 = vmatprep.subr.mxu0 0.0
        %1284 = vmatpush1.msra.mxu0 %v1243
        %1285 = vmatprep.subr.mxu0 0.0
        %1286 = vmatpush1.msra.mxu0 %v1242
        %1287 = vmatprep.subr.mxu0 0.0
        %1288 = vmatpush1.msra.mxu0 %v1241
        %1289 = vmatprep.subr.mxu0 0.0
        %1290 = vmatpush2.msra.mxu0 0.0
        %1291 = vmatprep.subr.mxu0 0.0
        %1292 = vmatpush2.msra.mxu0 0.0
        %1293 = vmatprep.subr.mxu0 0.0
        %1294 = vmatpush2.msra.mxu0 0.0
        %1295 = vmatprep.subr.mxu0 0.0
        %1296 = vmatpush2.msra.mxu0 0.0
        %1297 = vmatprep.subr.mxu0 0.0
        %1298 = vmatpush2.msra.mxu0 0.0
        %1299 = vmatprep.subr.mxu0 0.0
        %1300 = vmatpush2.msra.mxu0 0.0
        %1301 = vmatprep.subr.mxu0 0.0
        %1302 = vmatpush2.msra.mxu0 0.0
        %1303 = vmatprep.subr.mxu0 0.0
        %1304 = vmatpush2.msra.mxu0 0.0
        %1305 = vmatprep.subr.mxu0 0.0
        %1306 = vmatpush2.msra.mxu0 0.0
        %1307 = vmatprep.subr.mxu0 0.0
        %1308 = vmatpush2.msra.mxu0 0.0
        %1309 = vmatprep.subr.mxu0 0.0
        %1310 = vmatpush2.msra.mxu0 0.0
        %1311 = vmatprep.subr.mxu0 0.0
        %1312 = vmatpush2.msra.mxu0 0.0
        %1313 = vmatprep.subr.mxu0 0.0
        %1314 = vmatpush2.msra.mxu0 0.0
        %1315 = vmatprep.subr.mxu0 0.0
        %1316 = vmatpush2.msra.mxu0 0.0
        %1317 = vmatprep.subr.mxu0 0.0
        %1318 = vmatpush2.msra.mxu0 0.0
        %1319 = vmatprep.subr.mxu0 0.0
        %1320 = vmatpush2.msra.mxu0 0.0
        %1321 = vmatprep.mubr.f32.mxu0 0.0
        %1322 = vmatmul.mubr.f32.gmra.mxu0 %v1238
        %v1323 = vpop.f32.mrf.mxu0
        %v1324 = vadd.f32 0.0, %v1323
        %v1325 = vpop.f32.mrf.mxu0
        %1326 = vmatprep.mubr.f32.mxu0 0.0
        %1327 = vmatmul.mubr.f32.gmra.mxu0 %v1239
        %v1328 = vpop.f32.mrf.mxu0
        %v1329 = vadd.f32 0.0, %v1328
        %v1330 = vpop.f32.mrf.mxu0
        %1331 = vdwg.mxu0
        %v1332 = vmax.f32 %v1324, 0.0
        %v1333 = vmax.f32 %v1329, 0.0
        %1334 = vst [vmem:[#allocation2] sm:$0xff] %v1332
        %1335 = vst [vmem:[#allocation2 + $0x8] sm:$0xff] %v1333
        %p1336 = scmp.eq.s32.totalorder %s19, 1
        // Predicated region
        $region33: #{bad_transformer_unit.1} parent=27 // pred_check
          %p1337 = pneg %p1336
        $region34: #{bad_transformer_unit.1} parent=27 // pred_check_branch
          %1339 = sbr.rel (%p1337) target = $region36
        $region35: #{bad_transformer_unit.1} parent=27 // pred_region
          %1340 = vst [vmem:[#allocation3] sm:$0xff] %v1332
          %1341 = vst [vmem:[#allocation3 + $0x8] sm:$0xff] %v1333
        $region36: #{bad_transformer_unit.1} parent=27 // pred_fallthru
          _
        // Predicated region
        $region37: #{bad_transformer_unit.1} parent=27 // pred_check
          %p1342 = pneg %p96
        $region38: #{bad_transformer_unit.1} parent=27 // pred_check_branch
          %1344 = sbr.rel (%p1342) target = $region40
        $region39: #{bad_transformer_unit.1} parent=27 // pred_region
          %s1345 = smul.u32 2, %s18
          %s1347 = ssub.s32 256, 256
          %1348 = vsyncadd [#allocation4], %s1347
          %s1349 = smul.addr %s1345, 128
          %s1350 = scalar_lea.hbm %s2, %s1349
          %s1351 = sshll.u32 [#allocation3], 4
          %s1352 = int_to_ptr.vmem [resolvable:$true] %s1351
          %1357 = dma.vmem_to_hbm [thread:$0]  %s1352, 256, %s1350, [#allocation4], 128, 128, 8
        $region40: #{bad_transformer_unit.1} parent=27 // pred_fallthru
          _
        // Predicated region
        $region41: #{bad_transformer_unit.1} parent=27 // pred_check
          %p1358 = pneg %p96
        $region42: #{bad_transformer_unit.1} parent=27 // pred_check_branch
          %1360 = sbr.rel (%p1358) target = $region44
        $region43: #{bad_transformer_unit.1} parent=27 // pred_region
          %1361 = dma.done [#allocation4], 256
        $region44: #{bad_transformer_unit.1} parent=27 // pred_fallthru
          _
      $region28: #{bad_transformer_unit.1} parent=5 // pred_fallthru
        _
      %p1362 = scmp.le.s32.totalorder 2, %s9
      // Predicated region
      $region45: #{bad_transformer_unit.1} parent=5 // pred_check
        %p1363 = pneg %p1362
      $region46: #{bad_transformer_unit.1} parent=5 // pred_check_branch
        %1365 = sbr.rel (%p1363) target = $region48
      $region47: #{bad_transformer_unit.1} parent=5 // pred_region
        %s1366 = ssub.s32 %s9, 2
      $region48: #{bad_transformer_unit.1} parent=5 // pred_fallthru
        _
    $region6: #{bad_transformer_unit.1} parent=1 // loop_footer
      %s13 = sadd.s32 1, %s9
    $region7: #{bad_transformer_unit.1} parent=1 // loop_footer_branch
      %8 = sbr.rel target = $region3
    $region8: #{bad_transformer_unit.1} parent=1 // loop_exit
      _
    %1367 = vsyncpa [#allocation4], 1
    %s1368 = scalar_lea.sflag [#allocation4], 1
    %1369 = vsyncpa %s1368, 1

</llo_original>
